<compile_context>
chip_gen: v6e
topology: v6e:2x2x1
jax: 0.10.0
libtpu: 0.0.40
codegen_flags: <defaults>
</compile_context>

<pallas_src>
import functools
import math

import jax
import jax.numpy as jnp
from jax.experimental import pallas as pl
from jax.experimental.pallas import tpu as pltpu


def _cross_attn_kernel(x_ref, kt_ref, v_ref, wq_ref, wo_ref, qw_ref, bias_ref,
                       o_ref, acc_ref, *, G, D, n_groups, eps):
    # x_ref:    (1, TQ, H)
    # kt_ref:   (1, G, D, Skv_pad)   pre-normalized K, transposed
    # v_ref:    (1, G, Skv_pad, D)
    # wq_ref:   (1, H, G*D)          per-group Q projection weights
    # wo_ref:   (1, G*D, H)          per-group output projection weights
    # qw_ref:   (1, G*D) fp32        q RMSNorm affine (1/sqrt(D) folded in), tiled per head
    # bias_ref: (1, Skv_pad) fp32    0 for valid keys, -1e30 for padded keys
    # o_ref:    (1, TQ, H)
    # acc_ref:  (TQ, H) fp32 scratch (accumulates the wo projection over groups)
    g = pl.program_id(2)
    cdt = x_ref.dtype

    @pl.when(g == 0)
    def _():
        acc_ref[...] = jnp.zeros_like(acc_ref)

    x = x_ref[0]                                                         # (TQ, H)
    # Q projection for both heads of the group in one MXU call (N = G*D).
    q_all = jnp.dot(x, wq_ref[0], preferred_element_type=jnp.float32)   # (TQ, G*D)
    bias = bias_ref[...].astype(jnp.float32)                            # (1, Skv_pad)
    qw_all = qw_ref[0].astype(jnp.float32)                              # (G*D,)

    head_outs = []
    for h in range(G):  # static, tiny (G <= 2)
        q = q_all[:, h * D:(h + 1) * D]                                  # (TQ, D) f32
        # Q RMSNorm in fp32; the affine weight already folds 1/sqrt(D).
        q = q * jax.lax.rsqrt(jnp.mean(q * q, axis=-1, keepdims=True) + eps)
        q = (q * qw_all[h * D:(h + 1) * D]).astype(cdt)                  # (TQ, D)

        kt = kt_ref[0, h, :, :]                                          # (D, Skv_pad)
        s = jnp.dot(q, kt, preferred_element_type=jnp.float32) + bias    # (TQ, Skv_pad)
        s = s - jnp.max(s, axis=-1, keepdims=True)
        p = jnp.exp(s)
        denom = jnp.sum(p, axis=-1, keepdims=True)                       # (TQ, 1)
        vo = jnp.dot(p.astype(cdt), v_ref[0, h, :, :],
                     preferred_element_type=jnp.float32)                 # (TQ, D)
        # Deferred softmax normalization; exact reciprocal (only TQ elements).
        head_outs.append((vo * pl.reciprocal(denom)).astype(cdt))

    grp = head_outs[0] if G == 1 else jnp.concatenate(head_outs, axis=-1)  # (TQ, G*D)
    # One output-projection matmul per group: K = G*D (=256 when G=2, D=128).
    acc_ref[...] += jnp.dot(grp, wo_ref[0], preferred_element_type=jnp.float32)

    @pl.when(g == n_groups - 1)
    def _():
        o_ref[0] = acc_ref[...].astype(o_ref.dtype)


def _project_kv(enc, wkv, k_norm_w, *, n_heads, head_dim, eps, skv_pad, out_dtype):
    """Once-per-call K/V projection + k RMSNorm, done in plain XLA (hoisted)."""
    B, Skv, H = enc.shape
    D = head_dim
    xkv = jnp.einsum("bsh,hd->bsd", enc, wkv).reshape(B, Skv, n_heads, 2 * D)
    xk, xv = xkv[..., :D], xkv[..., D:]
    k32 = xk.astype(jnp.float32)
    k_n = k32 * jax.lax.rsqrt(jnp.mean(k32 * k32, axis=-1, keepdims=True) + eps)
    k_n = (k_n.astype(xk.dtype) * k_norm_w).astype(out_dtype)
    k_t = jnp.transpose(k_n, (0, 2, 3, 1))                 # (B, nh, D, Skv)
    v_h = jnp.transpose(xv, (0, 2, 1, 3)).astype(out_dtype)  # (B, nh, Skv, D)
    pad = skv_pad - Skv
    if pad:
        k_t = jnp.pad(k_t, ((0, 0), (0, 0), (0, 0), (0, pad)))
        v_h = jnp.pad(v_h, ((0, 0), (0, 0), (0, pad), (0, 0)))
    return k_t, v_h


def cross_attention(x, encoder_hidden_states, wq, wkv, wo, q_norm_w, k_norm_w,
                    *, head_dim, eps=1e-6, tq=256, heads_per_group=2):
    """x: (B, Sq, H); encoder_hidden_states: (B, Skv, H).
    wq: (H, H), wkv: (H, 2H), wo: (H, H) stored as (in, out) = torch weight.T.
    """
    B, Sq, H = x.shape
    Skv = encoder_hidden_states.shape[1]
    D = head_dim
    n_heads = H // D

    # Group heads (2 per step when possible) for 256-wide MXU on v6e/v7x and to
    # halve accumulator read-modify-write traffic (v5e vst bottleneck).
    G = heads_per_group if n_heads % heads_per_group == 0 else 1
    n_groups = n_heads // G
    GD = G * D

    # Query-block tiling; pad ragged Sq instead of the TQ = Sq fallback.
    TQ = min(tq, Sq)
    if TQ < Sq:
        TQ = max(8, (TQ // 8) * 8)      # sublane-aligned tiled q blocks
    Sq_pad = pl.cdiv(Sq, TQ) * TQ
    NQ = Sq_pad // TQ
    if Sq_pad != Sq:
        x = jnp.pad(x, ((0, 0), (0, Sq_pad - Sq), (0, 0)))

    # Lane-dense key axis + additive mask for the padded keys.
    Skv_pad = pl.cdiv(Skv, 128) * 128
    bias = jnp.where(jnp.arange(Skv_pad) < Skv, 0.0, -1e30)
    bias = bias.astype(jnp.float32).reshape(1, Skv_pad)

    # Hoisted K/V projection + k RMSNorm; K produced already transposed.
    k_t, v_h = _project_kv(encoder_hidden_states, wkv, k_norm_w,
                           n_heads=n_heads, head_dim=D, eps=eps,
                           skv_pad=Skv_pad, out_dtype=x.dtype)

    # Per-group contiguous weight layout (outputs / inputs are head-major).
    wq_g = wq.reshape(H, n_groups, GD).transpose(1, 0, 2)     # (ng, H, GD)
    wo_g = wo.reshape(n_groups, GD, H)                        # (ng, GD, H)

    # Fold the attention scale into the q-norm affine weight, tiled per head.
    qw = jnp.tile(q_norm_w.astype(jnp.float32) * (1.0 / math.sqrt(D)), (G,))
    qw = qw.reshape(1, GD)

    kernel = functools.partial(_cross_attn_kernel, G=G, D=D,
                               n_groups=n_groups, eps=eps)

    itemsize = jnp.dtype(x.dtype).itemsize
    cost = pl.CostEstimate(
        flops=2 * B * Sq_pad * H * (2 * H) + 4 * B * Sq_pad * Skv_pad * H,
        transcendentals=B * n_heads * Sq_pad * Skv_pad,
        bytes_accessed=(2 * B * Sq_pad * H                 # x in + out
                        + B * NQ * 2 * H * H               # wq/wo per q-block
                        + B * NQ * 2 * n_heads * Skv_pad * D) * itemsize,
    )

    out = pl.pallas_call(
        kernel,
        out_shape=jax.ShapeDtypeStruct((B, Sq_pad, H), x.dtype),
        grid_spec=pltpu.PrefetchScalarGridSpec(
            num_scalar_prefetch=0,
            grid=(B, NQ, n_groups),
            in_specs=[
                pl.BlockSpec((1, TQ, H), lambda b, qi, g: (b, qi, 0)),          # x
                pl.BlockSpec((1, G, D, Skv_pad), lambda b, qi, g: (b, g, 0, 0)),  # K^T
                pl.BlockSpec((1, G, Skv_pad, D), lambda b, qi, g: (b, g, 0, 0)),  # V
                pl.BlockSpec((1, H, GD), lambda b, qi, g: (g, 0, 0)),           # wq group
                pl.BlockSpec((1, GD, H), lambda b, qi, g: (g, 0, 0)),           # wo group
                pl.BlockSpec((1, GD), lambda b, qi, g: (0, 0)),                 # qw (scaled)
                pl.BlockSpec((1, Skv_pad), lambda b, qi, g: (0, 0)),            # key mask bias
            ],
            out_specs=pl.BlockSpec((1, TQ, H), lambda b, qi, g: (b, qi, 0)),
            scratch_shapes=[
                pltpu.VMEM((TQ, H), jnp.float32),     # wo accumulator (over groups)
            ],
        ),
        compiler_params=pltpu.CompilerParams(
            # Batch and Sq shard across TensorCores (K/V hoist removed the
            # per-batch cache dependency); the head-group axis is the reduction.
            dimension_semantics=("parallel", "parallel", "arbitrary"),
            vmem_limit_bytes=48 * 1024 * 1024,        # headroom on v7x's 64 MiB
        ),
        cost_estimate=cost,
    )(x, k_t, v_h, wq_g, wo_g, qw, bias)

    return out[:, :Sq, :] if Sq_pad != Sq else out


def cross_attention_ref(x, enc, wq, wkv, wo, q_norm_w, k_norm_w, *, head_dim, eps=1e-6):
    """Pure-JAX reference mirroring the PyTorch forward."""
    B, Sq, H = x.shape
    Skv = enc.shape[1]
    n_heads = H // head_dim

    xq = jnp.einsum("bsh,hd->bsd", x, wq).reshape(B, Sq, n_heads, head_dim)
    xkv = jnp.einsum("bsh,hd->bsd", enc, wkv).reshape(B, Skv, n_heads, 2 * head_dim)
    xk, xv = xkv[..., :head_dim], xkv[..., head_dim:]

    def rms(t, w):
        t32 = t.astype(jnp.float32)
        out = t32 * jax.lax.rsqrt(jnp.mean(t32 * t32, axis=-1, keepdims=True) + eps)
        return out.astype(t.dtype) * w

    xq = rms(xq, q_norm_w)
    xk = rms(xk, k_norm_w)

    scale = 1.0 / math.sqrt(head_dim)
    s = jnp.einsum("bqhd,bkhd->bhqk", xq, xk) * scale
    p = jax.nn.softmax(s, axis=-1)
    o = jnp.einsum("bhqk,bkhd->bqhd", p, xv).reshape(B, Sq, H)
    return jnp.einsum("bsh,hd->bsd", o, wo)


if __name__ == "__main__":
    # Small shapes consistent with the module:
    B, Sq, Skv = 2, 16, 8
    hidden_dim, head_dim = 64, 32          # n_heads = 2 -> one group of 2 heads

    key = jax.random.PRNGKey(0)
    kx, ke, k1, k2, k3 = jax.random.split(key, 5)

    x = jax.random.normal(kx, (B, Sq, hidden_dim), dtype=jnp.float32)
    enc = jax.random.normal(ke, (B, Skv, hidden_dim), dtype=jnp.float32)

    # ReplicatedLinear weights (bias=False). Stored as (in, out) = weight.T.
    wq = 0.05 * jax.random.normal(k1, (hidden_dim, hidden_dim), dtype=jnp.float32)
    wkv = 0.05 * jax.random.normal(k2, (hidden_dim, 2 * hidden_dim), dtype=jnp.float32)
    wo = 0.05 * jax.random.normal(k3, (hidden_dim, hidden_dim), dtype=jnp.float32)

    # StepVideoRMSNorm affine weights (init = ones, as in __init__).
    q_norm_w = jnp.ones((head_dim,), dtype=jnp.float32)
    k_norm_w = jnp.ones((head_dim,), dtype=jnp.float32)

    out = cross_attention(x, enc, wq, wkv, wo, q_norm_w, k_norm_w, head_dim=head_dim)
    out = jax.block_until_ready(out)

    ref = cross_attention_ref(x, enc, wq, wkv, wo, q_norm_w, k_norm_w, head_dim=head_dim)
    assert out.shape == (B, Sq, hidden_dim)
    assert jnp.allclose(out, ref, atol=1e-3, rtol=1e-3), (
        float(jnp.max(jnp.abs(out - ref))))

    print("KERNEL_OK")
</pallas_src>

<mosaic_0001>
module attributes {stable_mosaic.version = 11 : i64} {
  func.func @_cross_attn_kernel(%arg0: i32, %arg1: i32, %arg2: i32, %arg3: memref<1x16x64xf32, #tpu.memory_space<vmem>>, %arg4: memref<1x2x32x128xf32, #tpu.memory_space<vmem>>, %arg5: memref<1x2x128x32xf32, #tpu.memory_space<vmem>>, %arg6: memref<1x64x64xf32, #tpu.memory_space<vmem>>, %arg7: memref<1x64x64xf32, #tpu.memory_space<vmem>>, %arg8: memref<1x64xf32, #tpu.memory_space<vmem>>, %arg9: memref<1x128xf32, #tpu.memory_space<vmem>>, %arg10: memref<1x16x64xf32, #tpu.memory_space<vmem>>, %arg11: memref<16x64xf32, #tpu.memory_space<vmem>>) attributes {dimension_semantics = [#tpu.dimension_semantics<parallel>, #tpu.dimension_semantics<parallel>, #tpu.dimension_semantics<arbitrary>], iteration_bounds = array<i64: 2, 1, 1>, scalar_prefetch = 0 : i64, scratch_operands = 1 : i64, tpu.core_type = #tpu.core_type<tc>, window_params = [{transform_indices = @transform_0, window_bounds = array<i64: 1, 16, 64>}, {transform_indices = @transform_1, window_bounds = array<i64: 1, 2, 32, 128>}, {transform_indices = @transform_2, window_bounds = array<i64: 1, 2, 128, 32>}, {transform_indices = @transform_3, window_bounds = array<i64: 1, 64, 64>}, {transform_indices = @transform_4, window_bounds = array<i64: 1, 64, 64>}, {pipeline_mode = #tpu.pipeline_mode<synchronous>, transform_indices = @transform_5, window_bounds = array<i64: 1, 64>}, {pipeline_mode = #tpu.pipeline_mode<synchronous>, transform_indices = @transform_6, window_bounds = array<i64: 1, 128>}, {transform_indices = @transform_7, window_bounds = array<i64: 1, 16, 64>}]} {
    %c0_i32 = arith.constant 0 : i32
    %0 = arith.cmpi eq, %arg2, %c0_i32 : i32
    %1 = arith.extui %0 : i1 to i32
    %c0_i32_0 = arith.constant 0 : i32
    %2 = arith.cmpi ne, %1, %c0_i32_0 : i32
    scf.if %2 {
      %cst_49 = arith.constant 0.000000e+00 : f32
      %87 = vector.broadcast %cst_49 : f32 to vector<16x64xf32>
      %c0_50 = arith.constant 0 : index
      %c0_51 = arith.constant 0 : index
      %88 = vector.load %arg11[%c0_50, %c0_51] : memref<16x64xf32, #tpu.memory_space<vmem>>, vector<16x64xf32>
      tpu.vector_store %arg11[%c0_50, %c0_51], %87 {strides = array<i32>} : memref<16x64xf32, #tpu.memory_space<vmem>>, vector<16x64xf32>,
    } else {
    }
    %c0 = arith.constant 0 : index
    %c0_1 = arith.constant 0 : index
    %c0_2 = arith.constant 0 : index
    %3 = vector.load %arg3[%c0, %c0_1, %c0_2] : memref<1x16x64xf32, #tpu.memory_space<vmem>>, vector<1x16x64xf32>
    %4 = vector.shape_cast %3 : vector<1x16x64xf32> to vector<16x64xf32>
    %c0_3 = arith.constant 0 : index
    %c0_4 = arith.constant 0 : index
    %c0_5 = arith.constant 0 : index
    %5 = vector.load %arg6[%c0_3, %c0_4, %c0_5] : memref<1x64x64xf32, #tpu.memory_space<vmem>>, vector<1x64x64xf32>
    %6 = vector.shape_cast %5 : vector<1x64x64xf32> to vector<64x64xf32>
    %cst = arith.constant dense<0.000000e+00> : vector<16x64xf32>
    %7 = tpu.matmul %4, %6, %cst {dimension_numbers = #tpu.dot_dimension_numbers<[1], [0], [0], [1], [0, 0, 1, 1], [], []>} : vector<16x64xf32>, vector<64x64xf32>, vector<16x64xf32> -> vector<16x64xf32>
    %c0_6 = arith.constant 0 : index
    %c0_7 = arith.constant 0 : index
    %8 = vector.load %arg9[%c0_6, %c0_7] : memref<1x128xf32, #tpu.memory_space<vmem>>, vector<1x128xf32>
    %c0_8 = arith.constant 0 : index
    %c0_9 = arith.constant 0 : index
    %9 = vector.load %arg8[%c0_8, %c0_9] : memref<1x64xf32, #tpu.memory_space<vmem>>, vector<1x64xf32>
    %10 = vector.shape_cast %9 : vector<1x64xf32> to vector<64xf32>
    %11 = vector.extract_strided_slice %7 {offsets = [0, 0], sizes = [16, 32], strides = [1, 1]} : vector<16x64xf32> to vector<16x32xf32>
    %12 = arith.mulf %11, %11 : vector<16x32xf32>
    %cst_10 = arith.constant dense<0.000000e+00> : vector<16xf32>
    %13 = vector.multi_reduction <add>, %12, %cst_10 [1] : vector<16x32xf32> to vector<16xf32>
    %14 = vector.shape_cast %13 : vector<16xf32> to vector<16x1xf32>
    %cst_11 = arith.constant 3.200000e+01 : f32
    %15 = vector.broadcast %cst_11 : f32 to vector<16x1xf32>
    %16 = arith.divf %14, %15 : vector<16x1xf32>
    %cst_12 = arith.constant 9.99999997E-7 : f32
    %17 = vector.broadcast %cst_12 : f32 to vector<16x1xf32>
    %18 = arith.addf %16, %17 : vector<16x1xf32>
    %19 = math.rsqrt %18 : vector<16x1xf32>
    %20 = vector.broadcast %19 : vector<16x1xf32> to vector<16x32xf32>
    %21 = arith.mulf %11, %20 : vector<16x32xf32>
    %22 = vector.extract_strided_slice %10 {offsets = [0], sizes = [32], strides = [1]} : vector<64xf32> to vector<32xf32>
    %23 = vector.shape_cast %22 : vector<32xf32> to vector<1x32xf32>
    %24 = vector.broadcast %23 : vector<1x32xf32> to vector<16x32xf32>
    %25 = arith.mulf %21, %24 : vector<16x32xf32>
    %c0_13 = arith.constant 0 : index
    %c0_14 = arith.constant 0 : index
    %c0_15 = arith.constant 0 : index
    %c0_16 = arith.constant 0 : index
    %26 = vector.load %arg4[%c0_13, %c0_14, %c0_15, %c0_16] : memref<1x2x32x128xf32, #tpu.memory_space<vmem>>, vector<1x1x32x128xf32>
    %27 = vector.shape_cast %26 : vector<1x1x32x128xf32> to vector<32x128xf32>
    %cst_17 = arith.constant dense<0.000000e+00> : vector<16x128xf32>
    %28 = tpu.matmul %25, %27, %cst_17 {dimension_numbers = #tpu.dot_dimension_numbers<[1], [0], [0], [1], [0, 0, 1, 1], [], []>} : vector<16x32xf32>, vector<32x128xf32>, vector<16x128xf32> -> vector<16x128xf32>
    %29 = vector.broadcast %8 : vector<1x128xf32> to vector<16x128xf32>
    %30 = arith.addf %28, %29 : vector<16x128xf32>
    %cst_18 = arith.constant dense<0xFF800000> : vector<16xf32>
    %31 = vector.multi_reduction <maximumf>, %30, %cst_18 [1] : vector<16x128xf32> to vector<16xf32>
    %32 = vector.shape_cast %31 : vector<16xf32> to vector<16x1xf32>
    %33 = vector.broadcast %32 : vector<16x1xf32> to vector<16x128xf32>
    %34 = arith.subf %30, %33 : vector<16x128xf32>
    %35 = math.exp %34 : vector<16x128xf32>
    %cst_19 = arith.constant dense<0.000000e+00> : vector<16xf32>
    %36 = vector.multi_reduction <add>, %35, %cst_19 [1] : vector<16x128xf32> to vector<16xf32>
    %37 = vector.shape_cast %36 : vector<16xf32> to vector<16x1xf32>
    %c0_20 = arith.constant 0 : index
    %c0_21 = arith.constant 0 : index
    %c0_22 = arith.constant 0 : index
    %c0_23 = arith.constant 0 : index
    %38 = vector.load %arg5[%c0_20, %c0_21, %c0_22, %c0_23] : memref<1x2x128x32xf32, #tpu.memory_space<vmem>>, vector<1x1x128x32xf32>
    %39 = vector.shape_cast %38 : vector<1x1x128x32xf32> to vector<128x32xf32>
    %cst_24 = arith.constant dense<0.000000e+00> : vector<16x32xf32>
    %40 = tpu.matmul %35, %39, %cst_24 {dimension_numbers = #tpu.dot_dimension_numbers<[1], [0], [0], [1], [0, 0, 1, 1], [], []>} : vector<16x128xf32>, vector<128x32xf32>, vector<16x32xf32> -> vector<16x32xf32>
    %41 = tpu.reciprocal %37 : vector<16x1xf32> -> vector<16x1xf32>
    %42 = vector.broadcast %41 : vector<16x1xf32> to vector<16x32xf32>
    %43 = arith.mulf %40, %42 : vector<16x32xf32>
    %44 = vector.extract_strided_slice %7 {offsets = [0, 32], sizes = [16, 32], strides = [1, 1]} : vector<16x64xf32> to vector<16x32xf32>
    %45 = arith.mulf %44, %44 : vector<16x32xf32>
    %cst_25 = arith.constant dense<0.000000e+00> : vector<16xf32>
    %46 = vector.multi_reduction <add>, %45, %cst_25 [1] : vector<16x32xf32> to vector<16xf32>
    %47 = vector.shape_cast %46 : vector<16xf32> to vector<16x1xf32>
    %cst_26 = arith.constant 3.200000e+01 : f32
    %48 = vector.broadcast %cst_26 : f32 to vector<16x1xf32>
    %49 = arith.divf %47, %48 : vector<16x1xf32>
    %cst_27 = arith.constant 9.99999997E-7 : f32
    %50 = vector.broadcast %cst_27 : f32 to vector<16x1xf32>
    %51 = arith.addf %49, %50 : vector<16x1xf32>
    %52 = math.rsqrt %51 : vector<16x1xf32>
    %53 = vector.broadcast %52 : vector<16x1xf32> to vector<16x32xf32>
    %54 = arith.mulf %44, %53 : vector<16x32xf32>
    %55 = vector.extract_strided_slice %10 {offsets = [32], sizes = [32], strides = [1]} : vector<64xf32> to vector<32xf32>
    %56 = vector.shape_cast %55 : vector<32xf32> to vector<1x32xf32>
    %57 = vector.broadcast %56 : vector<1x32xf32> to vector<16x32xf32>
    %58 = arith.mulf %54, %57 : vector<16x32xf32>
    %c0_28 = arith.constant 0 : index
    %c1 = arith.constant 1 : index
    %c0_29 = arith.constant 0 : index
    %c0_30 = arith.constant 0 : index
    %59 = vector.load %arg4[%c0_28, %c1, %c0_29, %c0_30] : memref<1x2x32x128xf32, #tpu.memory_space<vmem>>, vector<1x1x32x128xf32>
    %60 = vector.shape_cast %59 : vector<1x1x32x128xf32> to vector<32x128xf32>
    %cst_31 = arith.constant dense<0.000000e+00> : vector<16x128xf32>
    %61 = tpu.matmul %58, %60, %cst_31 {dimension_numbers = #tpu.dot_dimension_numbers<[1], [0], [0], [1], [0, 0, 1, 1], [], []>} : vector<16x32xf32>, vector<32x128xf32>, vector<16x128xf32> -> vector<16x128xf32>
    %62 = vector.broadcast %8 : vector<1x128xf32> to vector<16x128xf32>
    %63 = arith.addf %61, %62 : vector<16x128xf32>
    %cst_32 = arith.constant dense<0xFF800000> : vector<16xf32>
    %64 = vector.multi_reduction <maximumf>, %63, %cst_32 [1] : vector<16x128xf32> to vector<16xf32>
    %65 = vector.shape_cast %64 : vector<16xf32> to vector<16x1xf32>
    %66 = vector.broadcast %65 : vector<16x1xf32> to vector<16x128xf32>
    %67 = arith.subf %63, %66 : vector<16x128xf32>
    %68 = math.exp %67 : vector<16x128xf32>
    %cst_33 = arith.constant dense<0.000000e+00> : vector<16xf32>
    %69 = vector.multi_reduction <add>, %68, %cst_33 [1] : vector<16x128xf32> to vector<16xf32>
    %70 = vector.shape_cast %69 : vector<16xf32> to vector<16x1xf32>
    %c0_34 = arith.constant 0 : index
    %c1_35 = arith.constant 1 : index
    %c0_36 = arith.constant 0 : index
    %c0_37 = arith.constant 0 : index
    %71 = vector.load %arg5[%c0_34, %c1_35, %c0_36, %c0_37] : memref<1x2x128x32xf32, #tpu.memory_space<vmem>>, vector<1x1x128x32xf32>
    %72 = vector.shape_cast %71 : vector<1x1x128x32xf32> to vector<128x32xf32>
    %cst_38 = arith.constant dense<0.000000e+00> : vector<16x32xf32>
    %73 = tpu.matmul %68, %72, %cst_38 {dimension_numbers = #tpu.dot_dimension_numbers<[1], [0], [0], [1], [0, 0, 1, 1], [], []>} : vector<16x128xf32>, vector<128x32xf32>, vector<16x32xf32> -> vector<16x32xf32>
    %74 = tpu.reciprocal %70 : vector<16x1xf32> -> vector<16x1xf32>
    %75 = vector.broadcast %74 : vector<16x1xf32> to vector<16x32xf32>
    %76 = arith.mulf %73, %75 : vector<16x32xf32>
    %77 = tpu.concatenate %43, %76 in 1 : vector<16x32xf32>, vector<16x32xf32> -> vector<16x64xf32>
    %c0_39 = arith.constant 0 : index
    %c0_40 = arith.constant 0 : index
    %78 = vector.load %arg11[%c0_39, %c0_40] : memref<16x64xf32, #tpu.memory_space<vmem>>, vector<16x64xf32>
    %c0_41 = arith.constant 0 : index
    %c0_42 = arith.constant 0 : index
    %c0_43 = arith.constant 0 : index
    %79 = vector.load %arg7[%c0_41, %c0_42, %c0_43] : memref<1x64x64xf32, #tpu.memory_space<vmem>>, vector<1x64x64xf32>
    %80 = vector.shape_cast %79 : vector<1x64x64xf32> to vector<64x64xf32>
    %cst_44 = arith.constant dense<0.000000e+00> : vector<16x64xf32>
    %81 = tpu.matmul %77, %80, %cst_44 {dimension_numbers = #tpu.dot_dimension_numbers<[1], [0], [0], [1], [0, 0, 1, 1], [], []>} : vector<16x64xf32>, vector<64x64xf32>, vector<16x64xf32> -> vector<16x64xf32>
    %82 = arith.addf %78, %81 : vector<16x64xf32>
    %c0_45 = arith.constant 0 : index
    %c0_46 = arith.constant 0 : index
    %83 = vector.load %arg11[%c0_45, %c0_46] : memref<16x64xf32, #tpu.memory_space<vmem>>, vector<16x64xf32>
    tpu.vector_store %arg11[%c0_45, %c0_46], %82 {strides = array<i32>} : memref<16x64xf32, #tpu.memory_space<vmem>>, vector<16x64xf32>,
    %c0_i32_47 = arith.constant 0 : i32
    %84 = arith.cmpi eq, %arg2, %c0_i32_47 : i32
    %85 = arith.extui %84 : i1 to i32
    %c0_i32_48 = arith.constant 0 : i32
    %86 = arith.cmpi ne, %85, %c0_i32_48 : i32
    scf.if %86 {
      %c0_49 = arith.constant 0 : index
      %c0_50 = arith.constant 0 : index
      %87 = vector.load %arg11[%c0_49, %c0_50] : memref<16x64xf32, #tpu.memory_space<vmem>>, vector<16x64xf32>
      %c0_51 = arith.constant 0 : index
      %c0_52 = arith.constant 0 : index
      %c0_53 = arith.constant 0 : index
      %88 = vector.load %arg10[%c0_51, %c0_52, %c0_53] : memref<1x16x64xf32, #tpu.memory_space<vmem>>, vector<1x16x64xf32>
      %89 = vector.shape_cast %88 : vector<1x16x64xf32> to vector<16x64xf32>
      %90 = vector.shape_cast %87 : vector<16x64xf32> to vector<1x16x64xf32>
      tpu.vector_store %arg10[%c0_51, %c0_52, %c0_53], %90 {strides = array<i32>} : memref<1x16x64xf32, #tpu.memory_space<vmem>>, vector<1x16x64xf32>,
    } else {
    }
    return
  }
  func.func @transform_0(%arg0: i32, %arg1: i32, %arg2: i32) -> (i32, i32, i32) {
    %c0_i32 = arith.constant 0 : i32
    %c0_i32_0 = arith.constant 0 : i32
    return %arg0, %arg1, %c0_i32 : i32, i32, i32
  }
  func.func @transform_1(%arg0: i32, %arg1: i32, %arg2: i32) -> (i32, i32, i32, i32) {
    %c0_i32 = arith.constant 0 : i32
    %c0_i32_0 = arith.constant 0 : i32
    %c0_i32_1 = arith.constant 0 : i32
    return %arg0, %arg2, %c0_i32, %c0_i32_0 : i32, i32, i32, i32
  }
  func.func @transform_2(%arg0: i32, %arg1: i32, %arg2: i32) -> (i32, i32, i32, i32) {
    %c0_i32 = arith.constant 0 : i32
    %c0_i32_0 = arith.constant 0 : i32
    %c0_i32_1 = arith.constant 0 : i32
    return %arg0, %arg2, %c0_i32, %c0_i32_0 : i32, i32, i32, i32
  }
  func.func @transform_3(%arg0: i32, %arg1: i32, %arg2: i32) -> (i32, i32, i32) {
    %c0_i32 = arith.constant 0 : i32
    %c0_i32_0 = arith.constant 0 : i32
    %c0_i32_1 = arith.constant 0 : i32
    return %arg2, %c0_i32, %c0_i32_0 : i32, i32, i32
  }
  func.func @transform_4(%arg0: i32, %arg1: i32, %arg2: i32) -> (i32, i32, i32) {
    %c0_i32 = arith.constant 0 : i32
    %c0_i32_0 = arith.constant 0 : i32
    %c0_i32_1 = arith.constant 0 : i32
    return %arg2, %c0_i32, %c0_i32_0 : i32, i32, i32
  }
  func.func @transform_5(%arg0: i32, %arg1: i32, %arg2: i32) -> (i32, i32) {
    %c0_i32 = arith.constant 0 : i32
    %c0_i32_0 = arith.constant 0 : i32
    %c0_i32_1 = arith.constant 0 : i32
    return %c0_i32, %c0_i32_0 : i32, i32
  }
  func.func @transform_6(%arg0: i32, %arg1: i32, %arg2: i32) -> (i32, i32) {
    %c0_i32 = arith.constant 0 : i32
    %c0_i32_0 = arith.constant 0 : i32
    %c0_i32_1 = arith.constant 0 : i32
    return %c0_i32, %c0_i32_0 : i32, i32
  }
  func.func @transform_7(%arg0: i32, %arg1: i32, %arg2: i32) -> (i32, i32, i32) {
    %c0_i32 = arith.constant 0 : i32
    %c0_i32_0 = arith.constant 0 : i32
    return %arg0, %arg1, %c0_i32 : i32, i32, i32
  }
}

</mosaic_0001>

<llo_original>
// kernel: tpu_custom_call.1
$region0: #{tpu_custom_call.1}
  #allocation0 [shape = 'u32[]', space=smem, size = 0x4, offset = 0x4, fixed_abs, tag = 'smem constant byte address 0x4 - core index']
  #allocation1 [shape = 'u32[144,128]{1,0:T(1,128)}', space=vmem, size = 0x12000, scoped, tag = 'internal scratch']
  #allocation2 [shape = 'f32[16,64]{1,0:T(8,128)}', space=vmem, size = 0x2000, scoped, tag = 'scratch operand']
  %s0 = inlined_call_operand.vmem [shape: f32[2,16,64], index: 0, kind: input, shape index: {}]
  %s1 = inlined_call_operand.vmem [shape: f32[2,2,32,128], index: 1, kind: input, shape index: {}]
  %s2 = inlined_call_operand.vmem [shape: f32[2,2,128,32], index: 2, kind: input, shape index: {}]
  %s3 = inlined_call_operand.vmem [shape: f32[1,64,64], index: 3, kind: input, shape index: {}]
  %s4 = inlined_call_operand.vmem [shape: f32[1,64,64], index: 4, kind: input, shape index: {}]
  %s5 = inlined_call_operand.vmem [shape: f32[1,64], index: 5, kind: input, shape index: {}]
  %s6 = inlined_call_operand.vmem [shape: f32[1,128], index: 6, kind: input, shape index: {}]
  %s7 = inlined_call_operand.hbm [shape: f32[2,16,64], index: 7, kind: output, shape index: {}]
  %s8 = sld [smem:[#allocation0]]
  $region69: #{tpu_custom_call.1} parent=0
    _
  %s10 = ssub.s32 1, %s8
  %s11 = scalar_select 0, %s10, %s8
  $region1: #{tpu_custom_call.1} parent=0
    #allocation3 [shape = 'u8[16384]{0}', space=vmem, size = 0x4000, scoped, tag = 'output window, operand 0']
    #allocation4 [shape = 's32[2]{0}', space=sflag, size = 0x8, scoped, tag = 'scoped memory for tpu_custom_call.1']
    %12 = vsyncpa [#allocation4], 0
    %s13 = scalar_lea.sflag [#allocation4], 1
    %14 = vsyncpa %s13, 0
    loop: start=0, step=1, limit=4
    $region2: #{tpu_custom_call.1} parent=1 // loop_pre_header
      _
    $region3: #{tpu_custom_call.1} parent=1 // loop_header
      %s16 = sphi 0, %s20
      %p17 = scmp.ge.s32.totalorder %s16, 4
      %s23 = sphi 0, %s42
      %s24 = sphi 0, %s38
      %s25 = sphi 0, %s34
      %s26 = sphi 0, %s23
      %s27 = sphi 0, %s24
      %s28 = sphi 0, %s25
      %s29 = sphi 0, %s26
      %s30 = sphi 0, %s27
      %s31 = sphi 0, %s28
      %s47 = sphi 0, %s49
      %s50 = sphi 0, %s47
      %s51 = sphi 0, %s50
      %s67 = sphi 0, %s51
      %s75 = sphi 0, %s77
      %s78 = sphi 0, %s75
      %s79 = sphi 0, %s78
      %s95 = sphi 0, %s79
      %s103 = sphi 0, %s105
      %s106 = sphi 0, %s103
      %s107 = sphi 0, %s106
      %s123 = sphi 0, %s107
      %s129 = sphi 0, %s131
      %s132 = sphi 0, %s129
      %s133 = sphi 0, %s132
      %s149 = sphi 0, %s133
      %s155 = sphi 0, %s157
      %s158 = sphi 0, %s155
      %s159 = sphi 0, %s158
      %s175 = sphi 0, %s159
      %s179 = sphi 0, %s179
      %s181 = sphi 0, %s179
      %s182 = sphi 0, %s181
      %s196 = sphi 0, %s182
      %s200 = sphi 0, %s200
      %s202 = sphi 0, %s200
      %s203 = sphi 0, %s202
      %s217 = sphi 0, %s203
      %s225 = sphi 0, %s227
      %s228 = sphi 0, %s225
      %s229 = sphi 0, %s228
      %s245 = sphi 0, %s229
    $region4: #{tpu_custom_call.1} parent=1 // loop_header_branch
      %19 = sbr.rel (%p17) target = $region8
    $region5: #{tpu_custom_call.1} parent=1 // loop_body
      %s21 = ssub.s32 %s16, 1
      %s22 = ssub.s32 %s16, 2
      %s32 = sadd.s32 1, %s25
      %p33 = scmp.ge.s32.totalorder %s32, 1
      %s34 = scalar_select %p33, 0, %s32
      %s35 = sadd.s32 1, %s24
      %s36 = scalar_select %p33, %s35, %s24
      %p37 = scmp.ge.s32.totalorder %s36, 1
      %s38 = scalar_select %p37, 0, %s36
      %s39 = sadd.s32 1, %s23
      %s40 = scalar_select %p37, %s39, %s23
      %p41 = scmp.ge.s32.totalorder %s40, 2
      %s42 = scalar_select %p41, 0, %s40
      %s43 = ssub.s32 %s23, %s42
      %s44 = ssub.s32 %s24, %s38
      %s45 = sor.u32 %s43, %s44
      %p46 = scmp.eq.s32.totalorder %s45, 0
      %s48 = sadd.s32 %s47, 1
      %s49 = scalar_select %p46, %s47, %s48
      %p52 = pneg %p46
      %p53 = scmp.eq.s32.totalorder %s16, 1
      %p54 = por %p52, %p53
      %p55 = scmp.ne.s32.totalorder %s47, %s50
      %p56 = scmp.eq.s32.totalorder %s16, 0
      %p57 = por %p55, %p56
      %p58 = scmp.ne.s32.totalorder %s47, %s50
      %p59 = scmp.eq.s32.totalorder %s21, 1
      %p60 = por %p58, %p59
      %p61 = scmp.ne.s32.totalorder %s50, %s51
      %p62 = scmp.eq.s32.totalorder %s21, 0
      %p63 = por %p61, %p62
      %p64 = scmp.ne.s32.totalorder %s50, %s51
      %p65 = scmp.eq.s32.totalorder %s22, 1
      %p66 = por %p64, %p65
      %p68 = scmp.ne.s32.totalorder %s51, %s67
      %p69 = scmp.eq.s32.totalorder %s22, 0
      %p70 = por %p68, %p69
      %s71 = ssub.s32 %s23, %s42
      %s72 = ssub.s32 %s25, %s34
      %s73 = sor.u32 %s71, %s72
      %p74 = scmp.eq.s32.totalorder %s73, 0
      %s76 = sadd.s32 %s75, 1
      %s77 = scalar_select %p74, %s75, %s76
      %p80 = pneg %p74
      %p81 = scmp.eq.s32.totalorder %s16, 1
      %p82 = por %p80, %p81
      %p83 = scmp.ne.s32.totalorder %s75, %s78
      %p84 = scmp.eq.s32.totalorder %s16, 0
      %p85 = por %p83, %p84
      %p86 = scmp.ne.s32.totalorder %s75, %s78
      %p87 = scmp.eq.s32.totalorder %s21, 1
      %p88 = por %p86, %p87
      %p89 = scmp.ne.s32.totalorder %s78, %s79
      %p90 = scmp.eq.s32.totalorder %s21, 0
      %p91 = por %p89, %p90
      %p92 = scmp.ne.s32.totalorder %s78, %s79
      %p93 = scmp.eq.s32.totalorder %s22, 1
      %p94 = por %p92, %p93
      %p96 = scmp.ne.s32.totalorder %s79, %s95
      %p97 = scmp.eq.s32.totalorder %s22, 0
      %p98 = por %p96, %p97
      %s99 = ssub.s32 %s23, %s42
      %s100 = ssub.s32 %s25, %s34
      %s101 = sor.u32 %s99, %s100
      %p102 = scmp.eq.s32.totalorder %s101, 0
      %s104 = sadd.s32 %s103, 1
      %s105 = scalar_select %p102, %s103, %s104
      %p108 = pneg %p102
      %p109 = scmp.eq.s32.totalorder %s16, 1
      %p110 = por %p108, %p109
      %p111 = scmp.ne.s32.totalorder %s103, %s106
      %p112 = scmp.eq.s32.totalorder %s16, 0
      %p113 = por %p111, %p112
      %p114 = scmp.ne.s32.totalorder %s103, %s106
      %p115 = scmp.eq.s32.totalorder %s21, 1
      %p116 = por %p114, %p115
      %p117 = scmp.ne.s32.totalorder %s106, %s107
      %p118 = scmp.eq.s32.totalorder %s21, 0
      %p119 = por %p117, %p118
      %p120 = scmp.ne.s32.totalorder %s106, %s107
      %p121 = scmp.eq.s32.totalorder %s22, 1
      %p122 = por %p120, %p121
      %p124 = scmp.ne.s32.totalorder %s107, %s123
      %p125 = scmp.eq.s32.totalorder %s22, 0
      %p126 = por %p124, %p125
      %s127 = ssub.s32 %s25, %s34
      %p128 = scmp.eq.s32.totalorder %s127, 0
      %s130 = sadd.s32 %s129, 1
      %s131 = scalar_select %p128, %s129, %s130
      %p134 = pneg %p128
      %p135 = scmp.eq.s32.totalorder %s16, 1
      %p136 = por %p134, %p135
      %p137 = scmp.ne.s32.totalorder %s129, %s132
      %p138 = scmp.eq.s32.totalorder %s16, 0
      %p139 = por %p137, %p138
      %p140 = scmp.ne.s32.totalorder %s129, %s132
      %p141 = scmp.eq.s32.totalorder %s21, 1
      %p142 = por %p140, %p141
      %p143 = scmp.ne.s32.totalorder %s132, %s133
      %p144 = scmp.eq.s32.totalorder %s21, 0
      %p145 = por %p143, %p144
      %p146 = scmp.ne.s32.totalorder %s132, %s133
      %p147 = scmp.eq.s32.totalorder %s22, 1
      %p148 = por %p146, %p147
      %p150 = scmp.ne.s32.totalorder %s133, %s149
      %p151 = scmp.eq.s32.totalorder %s22, 0
      %p152 = por %p150, %p151
      %s153 = ssub.s32 %s25, %s34
      %p154 = scmp.eq.s32.totalorder %s153, 0
      %s156 = sadd.s32 %s155, 1
      %s157 = scalar_select %p154, %s155, %s156
      %p160 = pneg %p154
      %p161 = scmp.eq.s32.totalorder %s16, 1
      %p162 = por %p160, %p161
      %p163 = scmp.ne.s32.totalorder %s155, %s158
      %p164 = scmp.eq.s32.totalorder %s16, 0
      %p165 = por %p163, %p164
      %p166 = scmp.ne.s32.totalorder %s155, %s158
      %p167 = scmp.eq.s32.totalorder %s21, 1
      %p168 = por %p166, %p167
      %p169 = scmp.ne.s32.totalorder %s158, %s159
      %p170 = scmp.eq.s32.totalorder %s21, 0
      %p171 = por %p169, %p170
      %p172 = scmp.ne.s32.totalorder %s158, %s159
      %p173 = scmp.eq.s32.totalorder %s22, 1
      %p174 = por %p172, %p173
      %p176 = scmp.ne.s32.totalorder %s159, %s175
      %p177 = scmp.eq.s32.totalorder %s22, 0
      %p178 = por %p176, %p177
      %s180 = sadd.s32 %s179, 1
      %p183 = scmp.eq.s32.totalorder %s16, 1
      %p184 = scmp.ne.s32.totalorder %s179, %s181
      %p185 = scmp.eq.s32.totalorder %s16, 0
      %p186 = por %p184, %p185
      %p187 = scmp.ne.s32.totalorder %s179, %s181
      %p188 = scmp.eq.s32.totalorder %s21, 1
      %p189 = por %p187, %p188
      %p190 = scmp.ne.s32.totalorder %s181, %s182
      %p191 = scmp.eq.s32.totalorder %s21, 0
      %p192 = por %p190, %p191
      %p193 = scmp.ne.s32.totalorder %s181, %s182
      %p194 = scmp.eq.s32.totalorder %s22, 1
      %p195 = por %p193, %p194
      %p197 = scmp.ne.s32.totalorder %s182, %s196
      %p198 = scmp.eq.s32.totalorder %s22, 0
      %p199 = por %p197, %p198
      %s201 = sadd.s32 %s200, 1
      %p204 = scmp.eq.s32.totalorder %s16, 1
      %p205 = scmp.ne.s32.totalorder %s200, %s202
      %p206 = scmp.eq.s32.totalorder %s16, 0
      %p207 = por %p205, %p206
      %p208 = scmp.ne.s32.totalorder %s200, %s202
      %p209 = scmp.eq.s32.totalorder %s21, 1
      %p210 = por %p208, %p209
      %p211 = scmp.ne.s32.totalorder %s202, %s203
      %p212 = scmp.eq.s32.totalorder %s21, 0
      %p213 = por %p211, %p212
      %p214 = scmp.ne.s32.totalorder %s202, %s203
      %p215 = scmp.eq.s32.totalorder %s22, 1
      %p216 = por %p214, %p215
      %p218 = scmp.ne.s32.totalorder %s203, %s217
      %p219 = scmp.eq.s32.totalorder %s22, 0
      %p220 = por %p218, %p219
      %s221 = ssub.s32 %s23, %s42
      %s222 = ssub.s32 %s24, %s38
      %s223 = sor.u32 %s221, %s222
      %p224 = scmp.eq.s32.totalorder %s223, 0
      %s226 = sadd.s32 %s225, 1
      %s227 = scalar_select %p224, %s225, %s226
      %p230 = pneg %p224
      %p231 = scmp.eq.s32.totalorder %s16, 1
      %p232 = por %p230, %p231
      %p233 = scmp.ne.s32.totalorder %s225, %s228
      %p234 = scmp.eq.s32.totalorder %s16, 0
      %p235 = por %p233, %p234
      %p236 = scmp.ne.s32.totalorder %s225, %s228
      %p237 = scmp.eq.s32.totalorder %s21, 1
      %p238 = por %p236, %p237
      %p239 = scmp.ne.s32.totalorder %s228, %s229
      %p240 = scmp.eq.s32.totalorder %s21, 0
      %p241 = por %p239, %p240
      %p242 = scmp.ne.s32.totalorder %s228, %s229
      %p243 = scmp.eq.s32.totalorder %s22, 1
      %p244 = por %p242, %p243
      %p246 = scmp.ne.s32.totalorder %s229, %s245
      %p247 = scmp.eq.s32.totalorder %s22, 0
      %p248 = por %p246, %p247
      %p249 = scmp.le.s32.totalorder 1, %s16
      %p250 = scmp.lt.s32.totalorder %s16, 3
      %p251 = pnand %p249, %p250
      %p252 = pneg %p251
      // Predicated region
      $region9: #{tpu_custom_call.1} parent=5 // pred_check
        _
      $region10: #{tpu_custom_call.1} parent=5 // pred_check_branch
        %254 = sbr.rel (%p251) target = $region12
      $region11: #{tpu_custom_call.1} parent=5 // pred_region
        %s255 = ssub.s32 %s16, 1
        // Predicated region
        $region13: #{tpu_custom_call.1} parent=11 // pred_check
          %p256 = pneg %p145
        $region14: #{tpu_custom_call.1} parent=11 // pred_check_branch
          %258 = sbr.rel (%p256) target = $region16
        $region15: #{tpu_custom_call.1} parent=11 // pred_region
          %p259 = scmp.lt.s32.totalorder %s28, 0
          %s260 = scalar_select %p259, %s28, 0
          %s261 = smul.addr %s260, 8
          %s262 = smul.addr %s261, 8
          %s263 = scalar_lea.vmem %s3, %s262
        $region16: #{tpu_custom_call.1} parent=11 // pred_fallthru
          _
        // Predicated region
        $region17: #{tpu_custom_call.1} parent=11 // pred_check
          %p264 = pneg %p171
        $region18: #{tpu_custom_call.1} parent=11 // pred_check_branch
          %266 = sbr.rel (%p264) target = $region20
        $region19: #{tpu_custom_call.1} parent=11 // pred_region
          %p267 = scmp.lt.s32.totalorder %s28, 0
          %s268 = scalar_select %p267, %s28, 0
          %s269 = smul.addr %s268, 8
          %s270 = smul.addr %s269, 8
          %s271 = scalar_lea.vmem %s4, %s270
        $region20: #{tpu_custom_call.1} parent=11 // pred_fallthru
          _
        // Predicated region
        $region21: #{tpu_custom_call.1} parent=11 // pred_check
          %p272 = pneg %p192
        $region22: #{tpu_custom_call.1} parent=11 // pred_check_branch
          %274 = sbr.rel (%p272) target = $region24
        $region23: #{tpu_custom_call.1} parent=11 // pred_region
          _
        $region24: #{tpu_custom_call.1} parent=11 // pred_fallthru
          _
        // Predicated region
        $region25: #{tpu_custom_call.1} parent=11 // pred_check
          %p275 = pneg %p213
        $region26: #{tpu_custom_call.1} parent=11 // pred_check_branch
          %277 = sbr.rel (%p275) target = $region28
        $region27: #{tpu_custom_call.1} parent=11 // pred_region
          _
        $region28: #{tpu_custom_call.1} parent=11 // pred_fallthru
          _
      $region12: #{tpu_custom_call.1} parent=5 // pred_fallthru
        _
      %p278 = scmp.lt.s32.totalorder %s16, 2
      // Predicated region
      $region29: #{tpu_custom_call.1} parent=5 // pred_check
        %p279 = pneg %p278
      $region30: #{tpu_custom_call.1} parent=5 // pred_check_branch
        %281 = sbr.rel (%p279) target = $region32
      $region31: #{tpu_custom_call.1} parent=5 // pred_region
        // Predicated region
        $region33: #{tpu_custom_call.1} parent=31 // pred_check
          %p282 = pneg %p57
        $region34: #{tpu_custom_call.1} parent=31 // pred_check_branch
          %284 = sbr.rel (%p282) target = $region36
        $region35: #{tpu_custom_call.1} parent=31 // pred_region
          %s285 = smul.u32 2, %s24
          %p286 = scmp.lt.s32.totalorder %s23, 1
          %s287 = scalar_select %p286, %s23, 1
          %p288 = scmp.lt.s32.totalorder %s285, 1
          %s289 = scalar_select %p288, %s285, 1
          %s290 = smul.addr %s287, 2
          %s291 = sadd.s32 %s289, %s290
          %s292 = smul.addr %s291, 8
          %s293 = scalar_lea.vmem %s0, %s292
          %s294 = smul.u32 2, %s24
        $region36: #{tpu_custom_call.1} parent=31 // pred_fallthru
          _
        // Predicated region
        $region37: #{tpu_custom_call.1} parent=31 // pred_check
          %p295 = pneg %p85
        $region38: #{tpu_custom_call.1} parent=31 // pred_check_branch
          %297 = sbr.rel (%p295) target = $region40
        $region39: #{tpu_custom_call.1} parent=31 // pred_region
          %s298 = smul.u32 2, %s25
          %p299 = scmp.lt.s32.totalorder %s23, 1
          %s300 = scalar_select %p299, %s23, 1
          %p301 = scmp.lt.s32.totalorder %s298, 1
          %s302 = scalar_select %p301, %s298, 1
          %s303 = smul.addr %s302, 4
          %s304 = smul.addr %s300, 8
          %s305 = sadd.s32 %s303, %s304
          %s306 = smul.addr %s305, 8
          %s307 = scalar_lea.vmem %s1, %s306
          %s308 = smul.u32 2, %s25
        $region40: #{tpu_custom_call.1} parent=31 // pred_fallthru
          _
        // Predicated region
        $region41: #{tpu_custom_call.1} parent=31 // pred_check
          %p309 = pneg %p113
        $region42: #{tpu_custom_call.1} parent=31 // pred_check_branch
          %311 = sbr.rel (%p309) target = $region44
        $region43: #{tpu_custom_call.1} parent=31 // pred_region
          %s312 = smul.u32 2, %s25
          %p313 = scmp.lt.s32.totalorder %s23, 1
          %s314 = scalar_select %p313, %s23, 1
          %p315 = scmp.lt.s32.totalorder %s312, 1
          %s316 = scalar_select %p315, %s312, 1
          %s317 = smul.addr %s316, 16
          %s318 = smul.addr %s314, 32
          %s319 = sadd.s32 %s317, %s318
          %s320 = smul.addr %s319, 8
          %s321 = scalar_lea.vmem %s2, %s320
          %s322 = smul.u32 2, %s25
        $region44: #{tpu_custom_call.1} parent=31 // pred_fallthru
          _
      $region32: #{tpu_custom_call.1} parent=5 // pred_fallthru
        _
      %p323 = scmp.le.s32.totalorder 1, %s16
      %p324 = scmp.lt.s32.totalorder %s16, 3
      %p325 = pnand %p323, %p324
      %p326 = pneg %p325
      // Predicated region
      $region45: #{tpu_custom_call.1} parent=5 // pred_check
        _
      $region46: #{tpu_custom_call.1} parent=5 // pred_check_branch
        %328 = sbr.rel (%p325) target = $region48
      $region47: #{tpu_custom_call.1} parent=5 // pred_region
        %s329 = ssub.s32 %s16, 1
        %s330 = smul.u32 2, %s27
        %p331 = scmp.lt.s32.totalorder %s26, 1
        %s332 = scalar_select %p331, %s26, 1
        %p333 = scmp.lt.s32.totalorder %s330, 1
        %s334 = scalar_select %p333, %s330, 1
        %s335 = smul.addr %s332, 2
        %s336 = sadd.s32 %s334, %s335
        %s337 = smul.addr %s336, 8
        %s338 = scalar_lea.vmem %s0, %s337
        %p339 = pneg %p63
        %p340 = pneg %p60
        %s341 = smul.u32 2, %s28
        %p342 = scmp.lt.s32.totalorder %s26, 1
        %s343 = scalar_select %p342, %s26, 1
        %p344 = scmp.lt.s32.totalorder %s341, 1
        %s345 = scalar_select %p344, %s341, 1
        %s346 = smul.addr %s345, 4
        %s347 = smul.addr %s343, 8
        %s348 = sadd.s32 %s346, %s347
        %s349 = smul.addr %s348, 8
        %s350 = scalar_lea.vmem %s1, %s349
        %p351 = pneg %p91
        %p352 = pneg %p88
        %s353 = smul.u32 2, %s28
        %p354 = scmp.lt.s32.totalorder %s26, 1
        %s355 = scalar_select %p354, %s26, 1
        %p356 = scmp.lt.s32.totalorder %s353, 1
        %s357 = scalar_select %p356, %s353, 1
        %s358 = smul.addr %s357, 16
        %s359 = smul.addr %s355, 32
        %s360 = sadd.s32 %s358, %s359
        %s361 = smul.addr %s360, 8
        %s362 = scalar_lea.vmem %s2, %s361
        %p363 = pneg %p119
        %p364 = pneg %p116
        %p365 = scmp.lt.s32.totalorder %s28, 0
        %s366 = scalar_select %p365, %s28, 0
        %s367 = smul.addr %s366, 8
        %s368 = smul.addr %s367, 8
        %s369 = scalar_lea.vmem %s3, %s368
        %p370 = pneg %p145
        %p371 = pneg %p142
        %p372 = scmp.lt.s32.totalorder %s28, 0
        %s373 = scalar_select %p372, %s28, 0
        %s374 = smul.addr %s373, 8
        %s375 = smul.addr %s374, 8
        %s376 = scalar_lea.vmem %s4, %s375
        %p377 = pneg %p171
        %p378 = pneg %p168
        %p379 = pneg %p192
        %p380 = pneg %p189
        %p381 = pneg %p213
        %p382 = pneg %p210
        %p383 = pneg %p241
        %p384 = pneg %p238
        %s385 = sand.u32 %s228, 1
        %s386 = scalar_lea.sflag [#allocation4], %s385
        %s387 = sand.u32 %s228, 1
        %s388 = smul.addr %s387, 16
        %s389 = scalar_lea.vmem [#allocation3], %s388
        %s390 = smul.u32 2, %s27
        %p391 = scmp.lt.s32.totalorder %s26, 1
        %s392 = scalar_select %p391, %s26, 1
        %p393 = scmp.lt.s32.totalorder %s390, 1
        %s394 = scalar_select %p393, %s390, 1
        %s395 = smul.addr %s392, 2
        %s396 = sadd.s32 %s394, %s395
        %s397 = smul.addr %s396, 8
        %s398 = scalar_lea.vmem %s0, %s397
        %s399 = smul.u32 2, %s27
        %s400 = smul.u32 2, %s28
        %p401 = scmp.lt.s32.totalorder %s26, 1
        %s402 = scalar_select %p401, %s26, 1
        %p403 = scmp.lt.s32.totalorder %s400, 1
        %s404 = scalar_select %p403, %s400, 1
        %s405 = smul.addr %s404, 4
        %s406 = smul.addr %s402, 8
        %s407 = sadd.s32 %s405, %s406
        %s408 = smul.addr %s407, 8
        %s409 = scalar_lea.vmem %s1, %s408
        %s410 = smul.u32 2, %s28
        %s411 = smul.u32 2, %s28
        %p412 = scmp.lt.s32.totalorder %s26, 1
        %s413 = scalar_select %p412, %s26, 1
        %p414 = scmp.lt.s32.totalorder %s411, 1
        %s415 = scalar_select %p414, %s411, 1
        %s416 = smul.addr %s415, 16
        %s417 = smul.addr %s413, 32
        %s418 = sadd.s32 %s416, %s417
        %s419 = smul.addr %s418, 8
        %s420 = scalar_lea.vmem %s2, %s419
        %s421 = smul.u32 2, %s28
        %p422 = scmp.lt.s32.totalorder %s28, 0
        %s423 = scalar_select %p422, %s28, 0
        %s424 = smul.addr %s423, 8
        %s425 = smul.addr %s424, 8
        %s426 = scalar_lea.vmem %s3, %s425
        %p427 = scmp.lt.s32.totalorder %s28, 0
        %s428 = scalar_select %p427, %s28, 0
        %s429 = smul.addr %s428, 8
        %s430 = smul.addr %s429, 8
        %s431 = scalar_lea.vmem %s4, %s430
        %s432 = smul.u32 2, %s27
        %p433 = scmp.eq.s32.totalorder %s28, 0
        // Predicated region
        $region49: #{tpu_custom_call.1} parent=47 // pred_check
          %p434 = pneg %p433
        $region50: #{tpu_custom_call.1} parent=47 // pred_check_branch
          %436 = sbr.rel (%p434) target = $region52
        $region51: #{tpu_custom_call.1} parent=47 // pred_region
          %vm437 = vcmask 523264
          %438 = vst.msk [vmem:[#allocation2] sm:$0xff] %vm437, 0.0
          %439 = vst.msk [vmem:[#allocation2 + $0x8] sm:$0xff] %vm437, 0.0
        $region52: #{tpu_custom_call.1} parent=47 // pred_fallthru
          _
        %v440 = vld [vmem:[%s398] sm:$0xff]
        %v441 = vld [vmem:[%s398 + $0x8] sm:$0xff]
        %v442 = vld [vmem:[%s426] sm:$0xff]
        %v443 = vld [vmem:[%s426 + $0x8] sm:$0xff]
        %v444 = vld [vmem:[%s426 + $0x10] sm:$0xff]
        %v445 = vld [vmem:[%s426 + $0x18] sm:$0xff]
        %v446 = vld [vmem:[%s426 + $0x20] sm:$0xff]
        %v447 = vld [vmem:[%s426 + $0x28] sm:$0xff]
        %v448 = vld [vmem:[%s426 + $0x30] sm:$0xff]
        %v449 = vld [vmem:[%s426 + $0x38] sm:$0xff]
        %vm450 = vcmask 523264
        %v452 = vsel %vm450, %v440, 0
        %v455 = vsel %vm450, %v441, 0
        %457 = vmatprep.subr.mxu0 0.0
        %458 = vmatpush1.msra.mxu0 0.0
        %459 = vmatprep.subr.mxu0 0.0
        %460 = vmatpush1.msra.mxu0 0.0
        %461 = vmatprep.subr.mxu0 0.0
        %462 = vmatpush1.msra.mxu0 0.0
        %463 = vmatprep.subr.mxu0 0.0
        %464 = vmatpush1.msra.mxu0 0.0
        %465 = vmatprep.subr.mxu0 0.0
        %466 = vmatpush1.msra.mxu0 0.0
        %467 = vmatprep.subr.mxu0 0.0
        %468 = vmatpush1.msra.mxu0 0.0
        %469 = vmatprep.subr.mxu0 0.0
        %470 = vmatpush1.msra.mxu0 0.0
        %471 = vmatprep.subr.mxu0 0.0
        %472 = vmatpush1.msra.mxu0 0.0
        %473 = vmatprep.subr.mxu0 0.0
        %474 = vmatpush1.msra.mxu0 %v449
        %475 = vmatprep.subr.mxu0 0.0
        %476 = vmatpush1.msra.mxu0 %v448
        %477 = vmatprep.subr.mxu0 0.0
        %478 = vmatpush1.msra.mxu0 %v447
        %479 = vmatprep.subr.mxu0 0.0
        %480 = vmatpush1.msra.mxu0 %v446
        %481 = vmatprep.subr.mxu0 0.0
        %482 = vmatpush1.msra.mxu0 %v445
        %483 = vmatprep.subr.mxu0 0.0
        %484 = vmatpush1.msra.mxu0 %v444
        %485 = vmatprep.subr.mxu0 0.0
        %486 = vmatpush1.msra.mxu0 %v443
        %487 = vmatprep.subr.mxu0 0.0
        %488 = vmatpush1.msra.mxu0 %v442
        %489 = vmatprep.subr.mxu0 0.0
        %490 = vmatpush2.msra.mxu0 0.0
        %491 = vmatprep.subr.mxu0 0.0
        %492 = vmatpush2.msra.mxu0 0.0
        %493 = vmatprep.subr.mxu0 0.0
        %494 = vmatpush2.msra.mxu0 0.0
        %495 = vmatprep.subr.mxu0 0.0
        %496 = vmatpush2.msra.mxu0 0.0
        %497 = vmatprep.subr.mxu0 0.0
        %498 = vmatpush2.msra.mxu0 0.0
        %499 = vmatprep.subr.mxu0 0.0
        %500 = vmatpush2.msra.mxu0 0.0
        %501 = vmatprep.subr.mxu0 0.0
        %502 = vmatpush2.msra.mxu0 0.0
        %503 = vmatprep.subr.mxu0 0.0
        %504 = vmatpush2.msra.mxu0 0.0
        %505 = vmatprep.subr.mxu0 0.0
        %506 = vmatpush2.msra.mxu0 0.0
        %507 = vmatprep.subr.mxu0 0.0
        %508 = vmatpush2.msra.mxu0 0.0
        %509 = vmatprep.subr.mxu0 0.0
        %510 = vmatpush2.msra.mxu0 0.0
        %511 = vmatprep.subr.mxu0 0.0
        %512 = vmatpush2.msra.mxu0 0.0
        %513 = vmatprep.subr.mxu0 0.0
        %514 = vmatpush2.msra.mxu0 0.0
        %515 = vmatprep.subr.mxu0 0.0
        %516 = vmatpush2.msra.mxu0 0.0
        %517 = vmatprep.subr.mxu0 0.0
        %518 = vmatpush2.msra.mxu0 0.0
        %519 = vmatprep.subr.mxu0 0.0
        %520 = vmatpush2.msra.mxu0 0.0
        %521 = vmatprep.mubr.f32.mxu0 0.0
        %522 = vmatmul.mubr.f32.gmra.mxu0 %v452
        %v523 = vpop.f32.mrf.mxu0
        %v524 = vadd.f32 0.0, %v523
        %v525 = vpop.f32.mrf.mxu0
        %526 = vmatprep.mubr.f32.mxu0 0.0
        %527 = vmatmul.mubr.f32.gmra.mxu0 %v455
        %v528 = vpop.f32.mrf.mxu0
        %v529 = vadd.f32 0.0, %v528
        %v530 = vpop.f32.mrf.mxu0
        %531 = vdwg.mxu0
        %v532 = vld [vmem:[%s6] sm:$0x1]
        %v533 = vld [vmem:[%s5] sm:$0x1]
        %v534 = vmul.f32 %v524, %v524
        %v535 = vmul.f32 %v529, %v529
        %vm536 = vcmask 261120
        %v537 = vsel %vm536, %v534, 0.0
        %538 = vadd.xlane.f32.xlu0 %v537
        %v539 = vpop.xlane.xlu0 %538
        %v540 = vsel %vm536, %v535, 0.0
        %541 = vadd.xlane.f32.xlu0 %v540
        %v542 = vpop.xlane.xlu0 %541
        %v543 = vrcp.pop 32.0
        %v544 = vmul.f32 %v539, %v543
        %v545 = vmul.f32 %v542, %v543
        %v546 = vadd.f32 %v544, 1e-06
        %v547 = vadd.f32 %v545, 1e-06
        %v548 = vrsqrt.pop %v546
        %v549 = vrsqrt.pop %v547
        %v550 = vmul.f32 %v524, %v548
        %v551 = vmul.f32 %v529, %v549
        %v553 = vlaneseq
        %v554 = vshrl.u32 %v553, 7
        %v555 = vsub.s32 0, %v554
        %v556 = vrot.slane %v533, %v555
        %v558 = vmul.f32 %v550, %v556
        %v559 = vmul.f32 %v551, %v556
        %v560 = vld [vmem:[%s409] sm:$0xff]
        %v561 = vld [vmem:[%s409 + $0x8] sm:$0xff]
        %v562 = vld [vmem:[%s409 + $0x10] sm:$0xff]
        %v563 = vld [vmem:[%s409 + $0x18] sm:$0xff]
        %v565 = vlaneseq
        %v566 = vshrl.u32 %v565, 7
        %v567 = vsub.s32 0, %v566
        %v568 = vrot.slane %v532, %v567
        %v571 = vsel %vm536, %v558, 0
        %v574 = vsel %vm536, %v559, 0
        %576 = vmatprep.subr.mxu0 0.0
        %577 = vmatpush1.msra.mxu0 0.0
        %578 = vmatprep.subr.mxu0 0.0
        %579 = vmatpush1.msra.mxu0 0.0
        %580 = vmatprep.subr.mxu0 0.0
        %581 = vmatpush1.msra.mxu0 0.0
        %582 = vmatprep.subr.mxu0 0.0
        %583 = vmatpush1.msra.mxu0 0.0
        %584 = vmatprep.subr.mxu0 0.0
        %585 = vmatpush1.msra.mxu0 0.0
        %586 = vmatprep.subr.mxu0 0.0
        %587 = vmatpush1.msra.mxu0 0.0
        %588 = vmatprep.subr.mxu0 0.0
        %589 = vmatpush1.msra.mxu0 0.0
        %590 = vmatprep.subr.mxu0 0.0
        %591 = vmatpush1.msra.mxu0 0.0
        %592 = vmatprep.subr.mxu0 0.0
        %593 = vmatpush1.msra.mxu0 0.0
        %594 = vmatprep.subr.mxu0 0.0
        %595 = vmatpush1.msra.mxu0 0.0
        %596 = vmatprep.subr.mxu0 0.0
        %597 = vmatpush1.msra.mxu0 0.0
        %598 = vmatprep.subr.mxu0 0.0
        %599 = vmatpush1.msra.mxu0 0.0
        %600 = vmatprep.subr.mxu0 0.0
        %601 = vmatpush1.msra.mxu0 %v563
        %602 = vmatprep.subr.mxu0 0.0
        %603 = vmatpush1.msra.mxu0 %v562
        %604 = vmatprep.subr.mxu0 0.0
        %605 = vmatpush1.msra.mxu0 %v561
        %606 = vmatprep.subr.mxu0 0.0
        %607 = vmatpush1.msra.mxu0 %v560
        %608 = vmatprep.subr.mxu0 0.0
        %609 = vmatpush2.msra.mxu0 0.0
        %610 = vmatprep.subr.mxu0 0.0
        %611 = vmatpush2.msra.mxu0 0.0
        %612 = vmatprep.subr.mxu0 0.0
        %613 = vmatpush2.msra.mxu0 0.0
        %614 = vmatprep.subr.mxu0 0.0
        %615 = vmatpush2.msra.mxu0 0.0
        %616 = vmatprep.subr.mxu0 0.0
        %617 = vmatpush2.msra.mxu0 0.0
        %618 = vmatprep.subr.mxu0 0.0
        %619 = vmatpush2.msra.mxu0 0.0
        %620 = vmatprep.subr.mxu0 0.0
        %621 = vmatpush2.msra.mxu0 0.0
        %622 = vmatprep.subr.mxu0 0.0
        %623 = vmatpush2.msra.mxu0 0.0
        %624 = vmatprep.subr.mxu0 0.0
        %625 = vmatpush2.msra.mxu0 0.0
        %626 = vmatprep.subr.mxu0 0.0
        %627 = vmatpush2.msra.mxu0 0.0
        %628 = vmatprep.subr.mxu0 0.0
        %629 = vmatpush2.msra.mxu0 0.0
        %630 = vmatprep.subr.mxu0 0.0
        %631 = vmatpush2.msra.mxu0 0.0
        %632 = vmatprep.subr.mxu0 0.0
        %633 = vmatpush2.msra.mxu0 0.0
        %634 = vmatprep.subr.mxu0 0.0
        %635 = vmatpush2.msra.mxu0 0.0
        %636 = vmatprep.subr.mxu0 0.0
        %637 = vmatpush2.msra.mxu0 0.0
        %638 = vmatprep.subr.mxu0 0.0
        %639 = vmatpush2.msra.mxu0 0.0
        %640 = vmatprep.mubr.f32.mxu0 0.0
        %641 = vmatmul.mubr.f32.gmra.mxu0 %v571
        %v642 = vpop.f32.mrf.mxu0
        %v643 = vadd.f32 %v568, %v642
        %v644 = vpop.f32.mrf.mxu0
        %645 = vmatprep.mubr.f32.mxu0 0.0
        %646 = vmatmul.mubr.f32.gmra.mxu0 %v574
        %v647 = vpop.f32.mrf.mxu0
        %v648 = vadd.f32 %v568, %v647
        %v649 = vpop.f32.mrf.mxu0
        %650 = vdwg.mxu0
        %651 = vmax.xlane.f32.xlu0 %v643
        %v652 = vpop.xlane.xlu0 %651
        %653 = vmax.xlane.f32.xlu0 %v648
        %v654 = vpop.xlane.xlu0 %653
        %v655 = vsub.f32 %v643, %v652
        %v656 = vsub.f32 %v648, %v654
        %v657 = vmul.f32 %v655, 1.442695
        %v658 = vpow.pop %v657
        %v659 = vmul.f32 %v656, 1.442695
        %v660 = vpow.pop %v659
        %661 = vadd.xlane.f32.xlu0 %v658
        %v662 = vpop.xlane.xlu0 %661
        %663 = vadd.xlane.f32.xlu0 %v660
        %v664 = vpop.xlane.xlu0 %663
        %v665 = vld [vmem:[%s420] sm:$0xff]
        %v666 = vld [vmem:[%s420 + $0x8] sm:$0xff]
        %v667 = vld [vmem:[%s420 + $0x10] sm:$0xff]
        %v668 = vld [vmem:[%s420 + $0x18] sm:$0xff]
        %v669 = vld [vmem:[%s420 + $0x20] sm:$0xff]
        %v670 = vld [vmem:[%s420 + $0x28] sm:$0xff]
        %v671 = vld [vmem:[%s420 + $0x30] sm:$0xff]
        %v672 = vld [vmem:[%s420 + $0x38] sm:$0xff]
        %v673 = vld [vmem:[%s420 + $0x40] sm:$0xff]
        %v674 = vld [vmem:[%s420 + $0x48] sm:$0xff]
        %v675 = vld [vmem:[%s420 + $0x50] sm:$0xff]
        %v676 = vld [vmem:[%s420 + $0x58] sm:$0xff]
        %v677 = vld [vmem:[%s420 + $0x60] sm:$0xff]
        %v678 = vld [vmem:[%s420 + $0x68] sm:$0xff]
        %v679 = vld [vmem:[%s420 + $0x70] sm:$0xff]
        %v680 = vld [vmem:[%s420 + $0x78] sm:$0xff]
        %681 = vmatprep.subr.mxu0 0.0
        %682 = vmatpush1.msra.mxu0 %v680
        %683 = vmatprep.subr.mxu0 0.0
        %684 = vmatpush1.msra.mxu0 %v679
        %685 = vmatprep.subr.mxu0 0.0
        %686 = vmatpush1.msra.mxu0 %v678
        %687 = vmatprep.subr.mxu0 0.0
        %688 = vmatpush1.msra.mxu0 %v677
        %689 = vmatprep.subr.mxu0 0.0
        %690 = vmatpush1.msra.mxu0 %v676
        %691 = vmatprep.subr.mxu0 0.0
        %692 = vmatpush1.msra.mxu0 %v675
        %693 = vmatprep.subr.mxu0 0.0
        %694 = vmatpush1.msra.mxu0 %v674
        %695 = vmatprep.subr.mxu0 0.0
        %696 = vmatpush1.msra.mxu0 %v673
        %697 = vmatprep.subr.mxu0 0.0
        %698 = vmatpush1.msra.mxu0 %v672
        %699 = vmatprep.subr.mxu0 0.0
        %700 = vmatpush1.msra.mxu0 %v671
        %701 = vmatprep.subr.mxu0 0.0
        %702 = vmatpush1.msra.mxu0 %v670
        %703 = vmatprep.subr.mxu0 0.0
        %704 = vmatpush1.msra.mxu0 %v669
        %705 = vmatprep.subr.mxu0 0.0
        %706 = vmatpush1.msra.mxu0 %v668
        %707 = vmatprep.subr.mxu0 0.0
        %708 = vmatpush1.msra.mxu0 %v667
        %709 = vmatprep.subr.mxu0 0.0
        %710 = vmatpush1.msra.mxu0 %v666
        %711 = vmatprep.subr.mxu0 0.0
        %712 = vmatpush1.msra.mxu0 %v665
        %713 = vmatprep.subr.mxu0 0.0
        %714 = vmatpush2.msra.mxu0 0.0
        %715 = vmatprep.subr.mxu0 0.0
        %716 = vmatpush2.msra.mxu0 0.0
        %717 = vmatprep.subr.mxu0 0.0
        %718 = vmatpush2.msra.mxu0 0.0
        %719 = vmatprep.subr.mxu0 0.0
        %720 = vmatpush2.msra.mxu0 0.0
        %721 = vmatprep.subr.mxu0 0.0
        %722 = vmatpush2.msra.mxu0 0.0
        %723 = vmatprep.subr.mxu0 0.0
        %724 = vmatpush2.msra.mxu0 0.0
        %725 = vmatprep.subr.mxu0 0.0
        %726 = vmatpush2.msra.mxu0 0.0
        %727 = vmatprep.subr.mxu0 0.0
        %728 = vmatpush2.msra.mxu0 0.0
        %729 = vmatprep.subr.mxu0 0.0
        %730 = vmatpush2.msra.mxu0 0.0
        %731 = vmatprep.subr.mxu0 0.0
        %732 = vmatpush2.msra.mxu0 0.0
        %733 = vmatprep.subr.mxu0 0.0
        %734 = vmatpush2.msra.mxu0 0.0
        %735 = vmatprep.subr.mxu0 0.0
        %736 = vmatpush2.msra.mxu0 0.0
        %737 = vmatprep.subr.mxu0 0.0
        %738 = vmatpush2.msra.mxu0 0.0
        %739 = vmatprep.subr.mxu0 0.0
        %740 = vmatpush2.msra.mxu0 0.0
        %741 = vmatprep.subr.mxu0 0.0
        %742 = vmatpush2.msra.mxu0 0.0
        %743 = vmatprep.subr.mxu0 0.0
        %744 = vmatpush2.msra.mxu0 0.0
        %745 = vmatprep.mubr.f32.mxu0 0.0
        %746 = vmatmul.mubr.f32.gmra.mxu0 %v658
        %v747 = vpop.f32.mrf.mxu0
        %v748 = vadd.f32 0.0, %v747
        %v749 = vpop.f32.mrf.mxu0
        %750 = vmatprep.mubr.f32.mxu0 0.0
        %751 = vmatmul.mubr.f32.gmra.mxu0 %v660
        %v752 = vpop.f32.mrf.mxu0
        %v753 = vadd.f32 0.0, %v752
        %v754 = vpop.f32.mrf.mxu0
        %755 = vdwg.mxu0
        %v756 = vrcp.pop %v662
        %v757 = vrcp.pop %v664
        %v758 = vmul.f32 %v748, %v756
        %v759 = vmul.f32 %v753, %v757
        %762 = vrot.lane.b32.xlu0 %v534, 96
        %v763 = vpop.permute.xlu0 %762
        %764 = vrot.lane.b32.xlu0 %v535, 96
        %v765 = vpop.permute.xlu0 %764
        %v768 = vsel %vm536, %v763, 0.0
        %769 = vadd.xlane.f32.xlu0 %v768
        %v770 = vpop.xlane.xlu0 %769
        %v771 = vsel %vm536, %v765, 0.0
        %772 = vadd.xlane.f32.xlu0 %v771
        %v773 = vpop.xlane.xlu0 %772
        %v774 = vmul.f32 %v770, %v543
        %v775 = vmul.f32 %v773, %v543
        %v776 = vadd.f32 %v774, 1e-06
        %v777 = vadd.f32 %v775, 1e-06
        %v778 = vrsqrt.pop %v776
        %v779 = vrsqrt.pop %v777
        %v780 = vmul.f32 %v524, %v778
        %v781 = vmul.f32 %v529, %v779
        %v782 = vmul.f32 %v780, %v556
        %v783 = vmul.f32 %v781, %v556
        %s784 = scalar_lea.vmem %s409, 32
        %v785 = vld [vmem:[%s784] sm:$0xff]
        %v786 = vld [vmem:[%s784 + $0x8] sm:$0xff]
        %v787 = vld [vmem:[%s784 + $0x10] sm:$0xff]
        %v788 = vld [vmem:[%s784 + $0x18] sm:$0xff]
        %791 = vrot.lane.b32.xlu0 %v782, 96
        %v792 = vpop.permute.xlu0 %791
        %793 = vrot.lane.b32.xlu0 %v783, 96
        %v794 = vpop.permute.xlu0 %793
        %v795 = vsel %vm536, %v792, 0
        %v797 = vsel %vm536, %v794, 0
        %799 = vmatprep.subr.mxu0 0.0
        %800 = vmatpush1.msra.mxu0 0.0
        %801 = vmatprep.subr.mxu0 0.0
        %802 = vmatpush1.msra.mxu0 0.0
        %803 = vmatprep.subr.mxu0 0.0
        %804 = vmatpush1.msra.mxu0 0.0
        %805 = vmatprep.subr.mxu0 0.0
        %806 = vmatpush1.msra.mxu0 0.0
        %807 = vmatprep.subr.mxu0 0.0
        %808 = vmatpush1.msra.mxu0 0.0
        %809 = vmatprep.subr.mxu0 0.0
        %810 = vmatpush1.msra.mxu0 0.0
        %811 = vmatprep.subr.mxu0 0.0
        %812 = vmatpush1.msra.mxu0 0.0
        %813 = vmatprep.subr.mxu0 0.0
        %814 = vmatpush1.msra.mxu0 0.0
        %815 = vmatprep.subr.mxu0 0.0
        %816 = vmatpush1.msra.mxu0 0.0
        %817 = vmatprep.subr.mxu0 0.0
        %818 = vmatpush1.msra.mxu0 0.0
        %819 = vmatprep.subr.mxu0 0.0
        %820 = vmatpush1.msra.mxu0 0.0
        %821 = vmatprep.subr.mxu0 0.0
        %822 = vmatpush1.msra.mxu0 0.0
        %823 = vmatprep.subr.mxu0 0.0
        %824 = vmatpush1.msra.mxu0 %v788
        %825 = vmatprep.subr.mxu0 0.0
        %826 = vmatpush1.msra.mxu0 %v787
        %827 = vmatprep.subr.mxu0 0.0
        %828 = vmatpush1.msra.mxu0 %v786
        %829 = vmatprep.subr.mxu0 0.0
        %830 = vmatpush1.msra.mxu0 %v785
        %831 = vmatprep.subr.mxu0 0.0
        %832 = vmatpush2.msra.mxu0 0.0
        %833 = vmatprep.subr.mxu0 0.0
        %834 = vmatpush2.msra.mxu0 0.0
        %835 = vmatprep.subr.mxu0 0.0
        %836 = vmatpush2.msra.mxu0 0.0
        %837 = vmatprep.subr.mxu0 0.0
        %838 = vmatpush2.msra.mxu0 0.0
        %839 = vmatprep.subr.mxu0 0.0
        %840 = vmatpush2.msra.mxu0 0.0
        %841 = vmatprep.subr.mxu0 0.0
        %842 = vmatpush2.msra.mxu0 0.0
        %843 = vmatprep.subr.mxu0 0.0
        %844 = vmatpush2.msra.mxu0 0.0
        %845 = vmatprep.subr.mxu0 0.0
        %846 = vmatpush2.msra.mxu0 0.0
        %847 = vmatprep.subr.mxu0 0.0
        %848 = vmatpush2.msra.mxu0 0.0
        %849 = vmatprep.subr.mxu0 0.0
        %850 = vmatpush2.msra.mxu0 0.0
        %851 = vmatprep.subr.mxu0 0.0
        %852 = vmatpush2.msra.mxu0 0.0
        %853 = vmatprep.subr.mxu0 0.0
        %854 = vmatpush2.msra.mxu0 0.0
        %855 = vmatprep.subr.mxu0 0.0
        %856 = vmatpush2.msra.mxu0 0.0
        %857 = vmatprep.subr.mxu0 0.0
        %858 = vmatpush2.msra.mxu0 0.0
        %859 = vmatprep.subr.mxu0 0.0
        %860 = vmatpush2.msra.mxu0 0.0
        %861 = vmatprep.subr.mxu0 0.0
        %862 = vmatpush2.msra.mxu0 0.0
        %863 = vmatprep.mubr.f32.mxu0 0.0
        %864 = vmatmul.mubr.f32.gmra.mxu0 %v795
        %v865 = vpop.f32.mrf.mxu0
        %v866 = vadd.f32 %v568, %v865
        %v867 = vpop.f32.mrf.mxu0
        %868 = vmatprep.mubr.f32.mxu0 0.0
        %869 = vmatmul.mubr.f32.gmra.mxu0 %v797
        %v870 = vpop.f32.mrf.mxu0
        %v871 = vadd.f32 %v568, %v870
        %v872 = vpop.f32.mrf.mxu0
        %873 = vdwg.mxu0
        %874 = vmax.xlane.f32.xlu0 %v866
        %v875 = vpop.xlane.xlu0 %874
        %876 = vmax.xlane.f32.xlu0 %v871
        %v877 = vpop.xlane.xlu0 %876
        %v878 = vsub.f32 %v866, %v875
        %v879 = vsub.f32 %v871, %v877
        %v880 = vmul.f32 %v878, 1.442695
        %v881 = vpow.pop %v880
        %v882 = vmul.f32 %v879, 1.442695
        %v883 = vpow.pop %v882
        %884 = vadd.xlane.f32.xlu0 %v881
        %v885 = vpop.xlane.xlu0 %884
        %886 = vadd.xlane.f32.xlu0 %v883
        %v887 = vpop.xlane.xlu0 %886
        %s888 = scalar_lea.vmem %s420, 128
        %v889 = vld [vmem:[%s888] sm:$0xff]
        %v890 = vld [vmem:[%s888 + $0x8] sm:$0xff]
        %v891 = vld [vmem:[%s888 + $0x10] sm:$0xff]
        %v892 = vld [vmem:[%s888 + $0x18] sm:$0xff]
        %v893 = vld [vmem:[%s888 + $0x20] sm:$0xff]
        %v894 = vld [vmem:[%s888 + $0x28] sm:$0xff]
        %v895 = vld [vmem:[%s888 + $0x30] sm:$0xff]
        %v896 = vld [vmem:[%s888 + $0x38] sm:$0xff]
        %v897 = vld [vmem:[%s888 + $0x40] sm:$0xff]
        %v898 = vld [vmem:[%s888 + $0x48] sm:$0xff]
        %v899 = vld [vmem:[%s888 + $0x50] sm:$0xff]
        %v900 = vld [vmem:[%s888 + $0x58] sm:$0xff]
        %v901 = vld [vmem:[%s888 + $0x60] sm:$0xff]
        %v902 = vld [vmem:[%s888 + $0x68] sm:$0xff]
        %v903 = vld [vmem:[%s888 + $0x70] sm:$0xff]
        %v904 = vld [vmem:[%s888 + $0x78] sm:$0xff]
        %905 = vmatprep.subr.mxu0 0.0
        %906 = vmatpush1.msra.mxu0 %v904
        %907 = vmatprep.subr.mxu0 0.0
        %908 = vmatpush1.msra.mxu0 %v903
        %909 = vmatprep.subr.mxu0 0.0
        %910 = vmatpush1.msra.mxu0 %v902
        %911 = vmatprep.subr.mxu0 0.0
        %912 = vmatpush1.msra.mxu0 %v901
        %913 = vmatprep.subr.mxu0 0.0
        %914 = vmatpush1.msra.mxu0 %v900
        %915 = vmatprep.subr.mxu0 0.0
        %916 = vmatpush1.msra.mxu0 %v899
        %917 = vmatprep.subr.mxu0 0.0
        %918 = vmatpush1.msra.mxu0 %v898
        %919 = vmatprep.subr.mxu0 0.0
        %920 = vmatpush1.msra.mxu0 %v897
        %921 = vmatprep.subr.mxu0 0.0
        %922 = vmatpush1.msra.mxu0 %v896
        %923 = vmatprep.subr.mxu0 0.0
        %924 = vmatpush1.msra.mxu0 %v895
        %925 = vmatprep.subr.mxu0 0.0
        %926 = vmatpush1.msra.mxu0 %v894
        %927 = vmatprep.subr.mxu0 0.0
        %928 = vmatpush1.msra.mxu0 %v893
        %929 = vmatprep.subr.mxu0 0.0
        %930 = vmatpush1.msra.mxu0 %v892
        %931 = vmatprep.subr.mxu0 0.0
        %932 = vmatpush1.msra.mxu0 %v891
        %933 = vmatprep.subr.mxu0 0.0
        %934 = vmatpush1.msra.mxu0 %v890
        %935 = vmatprep.subr.mxu0 0.0
        %936 = vmatpush1.msra.mxu0 %v889
        %937 = vmatprep.subr.mxu0 0.0
        %938 = vmatpush2.msra.mxu0 0.0
        %939 = vmatprep.subr.mxu0 0.0
        %940 = vmatpush2.msra.mxu0 0.0
        %941 = vmatprep.subr.mxu0 0.0
        %942 = vmatpush2.msra.mxu0 0.0
        %943 = vmatprep.subr.mxu0 0.0
        %944 = vmatpush2.msra.mxu0 0.0
        %945 = vmatprep.subr.mxu0 0.0
        %946 = vmatpush2.msra.mxu0 0.0
        %947 = vmatprep.subr.mxu0 0.0
        %948 = vmatpush2.msra.mxu0 0.0
        %949 = vmatprep.subr.mxu0 0.0
        %950 = vmatpush2.msra.mxu0 0.0
        %951 = vmatprep.subr.mxu0 0.0
        %952 = vmatpush2.msra.mxu0 0.0
        %953 = vmatprep.subr.mxu0 0.0
        %954 = vmatpush2.msra.mxu0 0.0
        %955 = vmatprep.subr.mxu0 0.0
        %956 = vmatpush2.msra.mxu0 0.0
        %957 = vmatprep.subr.mxu0 0.0
        %958 = vmatpush2.msra.mxu0 0.0
        %959 = vmatprep.subr.mxu0 0.0
        %960 = vmatpush2.msra.mxu0 0.0
        %961 = vmatprep.subr.mxu0 0.0
        %962 = vmatpush2.msra.mxu0 0.0
        %963 = vmatprep.subr.mxu0 0.0
        %964 = vmatpush2.msra.mxu0 0.0
        %965 = vmatprep.subr.mxu0 0.0
        %966 = vmatpush2.msra.mxu0 0.0
        %967 = vmatprep.subr.mxu0 0.0
        %968 = vmatpush2.msra.mxu0 0.0
        %969 = vmatprep.mubr.f32.mxu0 0.0
        %970 = vmatmul.mubr.f32.gmra.mxu0 %v881
        %v971 = vpop.f32.mrf.mxu0
        %v972 = vadd.f32 0.0, %v971
        %v973 = vpop.f32.mrf.mxu0
        %974 = vmatprep.mubr.f32.mxu0 0.0
        %975 = vmatmul.mubr.f32.gmra.mxu0 %v883
        %v976 = vpop.f32.mrf.mxu0
        %v977 = vadd.f32 0.0, %v976
        %v978 = vpop.f32.mrf.mxu0
        %979 = vdwg.mxu0
        %v980 = vrcp.pop %v885
        %v981 = vrcp.pop %v887
        %v982 = vmul.f32 %v972, %v980
        %v983 = vmul.f32 %v977, %v981
        %986 = vrot.lane.b32.xlu0 %v982, 32
        %v987 = vpop.permute.xlu0 %986
        %988 = vrot.lane.b32.xlu0 %v983, 32
        %v989 = vpop.permute.xlu0 %988
        %v992 = vsel %vm536, %v758, %v987
        %v993 = vsel %vm536, %v759, %v989
        %v994 = vld [vmem:[#allocation2] sm:$0xff]
        %v995 = vld [vmem:[#allocation2 + $0x8] sm:$0xff]
        %v996 = vld [vmem:[%s431] sm:$0xff]
        %v997 = vld [vmem:[%s431 + $0x8] sm:$0xff]
        %v998 = vld [vmem:[%s431 + $0x10] sm:$0xff]
        %v999 = vld [vmem:[%s431 + $0x18] sm:$0xff]
        %v1000 = vld [vmem:[%s431 + $0x20] sm:$0xff]
        %v1001 = vld [vmem:[%s431 + $0x28] sm:$0xff]
        %v1002 = vld [vmem:[%s431 + $0x30] sm:$0xff]
        %v1003 = vld [vmem:[%s431 + $0x38] sm:$0xff]
        %v1005 = vsel %vm450, %v992, 0
        %v1008 = vsel %vm450, %v993, 0
        %1010 = vmatprep.subr.mxu0 0.0
        %1011 = vmatpush1.msra.mxu0 0.0
        %1012 = vmatprep.subr.mxu0 0.0
        %1013 = vmatpush1.msra.mxu0 0.0
        %1014 = vmatprep.subr.mxu0 0.0
        %1015 = vmatpush1.msra.mxu0 0.0
        %1016 = vmatprep.subr.mxu0 0.0
        %1017 = vmatpush1.msra.mxu0 0.0
        %1018 = vmatprep.subr.mxu0 0.0
        %1019 = vmatpush1.msra.mxu0 0.0
        %1020 = vmatprep.subr.mxu0 0.0
        %1021 = vmatpush1.msra.mxu0 0.0
        %1022 = vmatprep.subr.mxu0 0.0
        %1023 = vmatpush1.msra.mxu0 0.0
        %1024 = vmatprep.subr.mxu0 0.0
        %1025 = vmatpush1.msra.mxu0 0.0
        %1026 = vmatprep.subr.mxu0 0.0
        %1027 = vmatpush1.msra.mxu0 %v1003
        %1028 = vmatprep.subr.mxu0 0.0
        %1029 = vmatpush1.msra.mxu0 %v1002
        %1030 = vmatprep.subr.mxu0 0.0
        %1031 = vmatpush1.msra.mxu0 %v1001
        %1032 = vmatprep.subr.mxu0 0.0
        %1033 = vmatpush1.msra.mxu0 %v1000
        %1034 = vmatprep.subr.mxu0 0.0
        %1035 = vmatpush1.msra.mxu0 %v999
        %1036 = vmatprep.subr.mxu0 0.0
        %1037 = vmatpush1.msra.mxu0 %v998
        %1038 = vmatprep.subr.mxu0 0.0
        %1039 = vmatpush1.msra.mxu0 %v997
        %1040 = vmatprep.subr.mxu0 0.0
        %1041 = vmatpush1.msra.mxu0 %v996
        %1042 = vmatprep.subr.mxu0 0.0
        %1043 = vmatpush2.msra.mxu0 0.0
        %1044 = vmatprep.subr.mxu0 0.0
        %1045 = vmatpush2.msra.mxu0 0.0
        %1046 = vmatprep.subr.mxu0 0.0
        %1047 = vmatpush2.msra.mxu0 0.0
        %1048 = vmatprep.subr.mxu0 0.0
        %1049 = vmatpush2.msra.mxu0 0.0
        %1050 = vmatprep.subr.mxu0 0.0
        %1051 = vmatpush2.msra.mxu0 0.0
        %1052 = vmatprep.subr.mxu0 0.0
        %1053 = vmatpush2.msra.mxu0 0.0
        %1054 = vmatprep.subr.mxu0 0.0
        %1055 = vmatpush2.msra.mxu0 0.0
        %1056 = vmatprep.subr.mxu0 0.0
        %1057 = vmatpush2.msra.mxu0 0.0
        %1058 = vmatprep.subr.mxu0 0.0
        %1059 = vmatpush2.msra.mxu0 0.0
        %1060 = vmatprep.subr.mxu0 0.0
        %1061 = vmatpush2.msra.mxu0 0.0
        %1062 = vmatprep.subr.mxu0 0.0
        %1063 = vmatpush2.msra.mxu0 0.0
        %1064 = vmatprep.subr.mxu0 0.0
        %1065 = vmatpush2.msra.mxu0 0.0
        %1066 = vmatprep.subr.mxu0 0.0
        %1067 = vmatpush2.msra.mxu0 0.0
        %1068 = vmatprep.subr.mxu0 0.0
        %1069 = vmatpush2.msra.mxu0 0.0
        %1070 = vmatprep.subr.mxu0 0.0
        %1071 = vmatpush2.msra.mxu0 0.0
        %1072 = vmatprep.subr.mxu0 0.0
        %1073 = vmatpush2.msra.mxu0 0.0
        %1074 = vmatprep.mubr.f32.mxu0 0.0
        %1075 = vmatmul.mubr.f32.gmra.mxu0 %v1005
        %v1076 = vpop.f32.mrf.mxu0
        %v1077 = vadd.f32 0.0, %v1076
        %v1078 = vpop.f32.mrf.mxu0
        %1079 = vmatprep.mubr.f32.mxu0 0.0
        %1080 = vmatmul.mubr.f32.gmra.mxu0 %v1008
        %v1081 = vpop.f32.mrf.mxu0
        %v1082 = vadd.f32 0.0, %v1081
        %v1083 = vpop.f32.mrf.mxu0
        %1084 = vdwg.mxu0
        %v1085 = vadd.f32 %v994, %v1077
        %v1086 = vadd.f32 %v995, %v1082
        %1087 = vst.msk [vmem:[#allocation2] sm:$0xff] %vm450, %v1085
        %1088 = vst.msk [vmem:[#allocation2 + $0x8] sm:$0xff] %vm450, %v1086
        // Predicated region
        $region53: #{tpu_custom_call.1} parent=47 // pred_check
          %p1089 = pneg %p433
        $region54: #{tpu_custom_call.1} parent=47 // pred_check_branch
          %1091 = sbr.rel (%p1089) target = $region56
        $region55: #{tpu_custom_call.1} parent=47 // pred_region
          %v1092 = vld [vmem:[#allocation2] sm:$0xff]
          %v1093 = vld [vmem:[#allocation2 + $0x8] sm:$0xff]
          %1094 = vst.msk [vmem:[%s389] sm:$0xff] %vm450, %v1092
          %1095 = vst.msk [vmem:[%s389 + $0x8] sm:$0xff] %vm450, %v1093
        $region56: #{tpu_custom_call.1} parent=47 // pred_fallthru
          _
        %s1096 = sand.u32 %s228, 1
        %s1097 = scalar_lea.sflag [#allocation4], %s1096
        %s1098 = sand.u32 %s228, 1
        %s1099 = smul.addr %s1098, 16
        %s1100 = scalar_lea.vmem [#allocation3], %s1099
        // Predicated region
        $region57: #{tpu_custom_call.1} parent=47 // pred_check
          %p1101 = pneg %p238
        $region58: #{tpu_custom_call.1} parent=47 // pred_check_branch
          %1103 = sbr.rel (%p1101) target = $region60
        $region59: #{tpu_custom_call.1} parent=47 // pred_region
          %s1104 = smul.u32 2, %s27
          %s1106 = ssub.s32 256, 256
          %1107 = vsyncadd %s1097, %s1106
          %s1108 = smul.addr %s26, 2
          %s1109 = sadd.s32 %s1104, %s1108
          %s1110 = smul.addr %s1109, 128
          %s1111 = scalar_lea.hbm %s7, %s1110
          %s1112 = sshll.u32 %s1100, 4
          %s1113 = int_to_ptr.vmem [resolvable:$true] %s1112
          %1118 = dma.vmem_to_hbm [thread:$0]  %s1113, 256, %s1111, %s1097, 128, 128, 8
        $region60: #{tpu_custom_call.1} parent=47 // pred_fallthru
          _
      $region48: #{tpu_custom_call.1} parent=5 // pred_fallthru
        _
      %p1119 = scmp.le.s32.totalorder 2, %s16
      // Predicated region
      $region61: #{tpu_custom_call.1} parent=5 // pred_check
        %p1120 = pneg %p1119
      $region62: #{tpu_custom_call.1} parent=5 // pred_check_branch
        %1122 = sbr.rel (%p1120) target = $region64
      $region63: #{tpu_custom_call.1} parent=5 // pred_region
        %s1123 = ssub.s32 %s16, 2
        // Predicated region
        $region65: #{tpu_custom_call.1} parent=63 // pred_check
          %p1124 = pneg %p244
        $region66: #{tpu_custom_call.1} parent=63 // pred_check_branch
          %1126 = sbr.rel (%p1124) target = $region68
        $region67: #{tpu_custom_call.1} parent=63 // pred_region
          %s1127 = sand.u32 %s229, 1
          %s1128 = scalar_lea.sflag [#allocation4], %s1127
          %s1129 = sand.u32 %s229, 1
          %s1130 = smul.addr %s1129, 16
          %s1131 = scalar_lea.vmem [#allocation3], %s1130
          %1132 = dma.done %s1128, 256
        $region68: #{tpu_custom_call.1} parent=63 // pred_fallthru
          _
      $region64: #{tpu_custom_call.1} parent=5 // pred_fallthru
        _
    $region6: #{tpu_custom_call.1} parent=1 // loop_footer
      %s20 = sadd.s32 1, %s16
    $region7: #{tpu_custom_call.1} parent=1 // loop_footer_branch
      %15 = sbr.rel target = $region3
    $region8: #{tpu_custom_call.1} parent=1 // loop_exit
      _
    %1133 = vsyncpa [#allocation4], 1
    %s1134 = scalar_lea.sflag [#allocation4], 1
    %1135 = vsyncpa %s1134, 1

</llo_original>
